<compile_context>
chip_gen: v7x
topology: tpu7x:2x2x1
jax: 0.10.0
libtpu: 0.0.40
codegen_flags: <defaults>
</compile_context>

<pallas_src>
import functools

import jax
import jax.numpy as jnp
from jax import lax
from jax.experimental import pallas as pl
from jax.experimental.pallas import tpu as pltpu

_LANE = 128


def _rmsnorm_kernel(x_ref, w_ref, o_ref, *, inv_dim, eps):
    x = x_ref[...]                                   # (tile, dim_p), input dtype
    x32 = x.astype(jnp.float32)                      # `_norm(x.float())`
    # sum * (1/dim) instead of mean: exact with zero-padded lanes and avoids a
    # per-element divide (VALU-friendly on v5e).
    ms = jnp.sum(x32 * x32, axis=-1, keepdims=True) * inv_dim
    normed = x32 * lax.rsqrt(ms + eps)               # rsqrt on the EUP
    normed_xdtype = normed.astype(x.dtype)           # `.type_as(x)`
    out = normed_xdtype * w_ref[...]                 # (1, dim_p) broadcast; promotes like torch
    o_ref[...] = out.astype(o_ref.dtype)


def rms_norm(x, weight, eps: float = 1e-6, *,
             max_rows_per_tile: int = 1024,
             promote_output: bool = True):
    """Pallas RMSNorm. x: [..., dim]; weight: [dim] (float32 in the module)."""
    dim = x.shape[-1]
    assert weight.shape == (dim,)
    lead_shape = x.shape[:-1]
    rows = 1
    for s in lead_shape:
        rows *= s
    x2d = x.reshape(rows, dim)

    # Output dtype: PyTorch promotion of (x.dtype, weight.dtype) by default.
    out_dtype = jnp.promote_types(x.dtype, weight.dtype) if promote_output else x.dtype

    in_bytes = jnp.dtype(x.dtype).itemsize
    out_bytes = jnp.dtype(out_dtype).itemsize
    w_bytes = jnp.dtype(weight.dtype).itemsize

    # Pad the feature dim to a lane multiple so output stores are lane-dense.
    dim_p = ((dim + _LANE - 1) // _LANE) * _LANE

    # Sublane packing for the input dtype: 16 rows/vreg group for 16-bit, 8 for 32-bit.
    sublane = max(32 // in_bytes, 8) if in_bytes < 4 else 8

    # Pick the largest row tile whose double-buffered working set
    # (2x input tile + 2x output tile) fits a conservative 32 MiB VMEM budget
    # (safe on v5e/v6e with 128 MiB physical and v7x with 64 MiB).
    budget = 32 * 1024 * 1024
    bytes_per_row = dim_p * (in_bytes + out_bytes)
    tile_cap = max(budget // (2 * bytes_per_row), sublane)
    tile_cap = (tile_cap // sublane) * sublane
    tile = min(max_rows_per_tile, tile_cap)
    # Don't tile past the (sublane-rounded) row count for small inputs.
    rows_rounded = ((rows + sublane - 1) // sublane) * sublane
    tile = max(min(tile, rows_rounded), sublane)
    tile = (tile // sublane) * sublane

    grid_rows = pl.cdiv(rows, tile)
    rows_p = grid_rows * tile

    # Zero-pad rows / features; padded lanes contribute 0 to the sum and
    # padded rows are sliced off below.
    if rows_p != rows or dim_p != dim:
        x2d = jnp.pad(x2d, ((0, rows_p - rows), (0, dim_p - dim)))
    w2d = weight.reshape(1, dim)
    if dim_p != dim:
        w2d = jnp.pad(w2d, ((0, 0), (0, dim_p - dim)))

    footprint = (2 * tile * dim_p * in_bytes          # double-buffered input
                 + 2 * tile * dim_p * out_bytes       # double-buffered output
                 + dim_p * w_bytes)                   # resident weight
    vmem_limit = int(min(max(2 * footprint, 32 * 1024 * 1024), 48 * 1024 * 1024))

    out2d = pl.pallas_call(
        functools.partial(_rmsnorm_kernel, inv_dim=1.0 / dim, eps=eps),
        out_shape=jax.ShapeDtypeStruct((rows_p, dim_p), out_dtype),
        grid_spec=pltpu.PrefetchScalarGridSpec(
            num_scalar_prefetch=0,
            grid=(grid_rows,),
            in_specs=[
                pl.BlockSpec((tile, dim_p), lambda i: (i, 0)),   # x rows tile
                pl.BlockSpec((1, dim_p), lambda i: (0, 0)),      # weight (resident)
            ],
            out_specs=pl.BlockSpec((tile, dim_p), lambda i: (i, 0)),
        ),
        compiler_params=pltpu.CompilerParams(
            dimension_semantics=("parallel",),
            vmem_limit_bytes=vmem_limit,
        ),
    )(x2d, w2d)

    out2d = out2d[:rows, :dim]
    return out2d.reshape(*lead_shape, dim)


if __name__ == "__main__":
    key = jax.random.PRNGKey(0)
    B, S, D = 2, 8, 32
    x = jax.random.normal(key, (B, S, D), dtype=jnp.float32).astype(jnp.bfloat16)

    # Parameter init as in the module's __init__ / reset_parameters: ones(dim), f32.
    weight = jnp.ones((D,), dtype=jnp.float32)

    out = rms_norm(x, weight, eps=1e-6)
    out = jax.block_until_ready(out)

    # Reference check in plain JAX (same math as the PyTorch module).
    x32 = x.astype(jnp.float32)
    ref = (x32 * lax.rsqrt(jnp.mean(x32 * x32, axis=-1, keepdims=True) + 1e-6))
    ref = ref.astype(x.dtype) * weight
    assert out.shape == (B, S, D)
    assert out.dtype == ref.dtype
    assert jnp.allclose(out, ref, atol=1e-5, rtol=1e-5)

    print("KERNEL_OK")
</pallas_src>

<mosaic_0001>
module attributes {stable_mosaic.version = 11 : i64} {
  func.func @_rmsnorm_kernel(%arg0: i32, %arg1: memref<16x128xbf16, #tpu.memory_space<vmem>>, %arg2: memref<1x128xf32, #tpu.memory_space<vmem>>, %arg3: memref<16x128xf32, #tpu.memory_space<vmem>>) attributes {dimension_semantics = [#tpu.dimension_semantics<parallel>], iteration_bounds = array<i64: 1>, scalar_prefetch = 0 : i64, scratch_operands = 0 : i64, tpu.core_type = #tpu.core_type<tc>, window_params = [{transform_indices = @transform_0, window_bounds = array<i64: 16, 128>}, {pipeline_mode = #tpu.pipeline_mode<synchronous>, transform_indices = @transform_1, window_bounds = array<i64: 1, 128>}, {transform_indices = @transform_2, window_bounds = array<i64: 16, 128>}]} {
    %c0 = arith.constant 0 : index
    %c0_0 = arith.constant 0 : index
    %0 = vector.load %arg1[%c0, %c0_0] : memref<16x128xbf16, #tpu.memory_space<vmem>>, vector<16x128xbf16>
    %1 = arith.extf %0 : vector<16x128xbf16> to vector<16x128xf32>
    %2 = arith.mulf %1, %1 : vector<16x128xf32>
    %cst = arith.constant dense<0.000000e+00> : vector<16xf32>
    %3 = vector.multi_reduction <add>, %2, %cst [1] : vector<16x128xf32> to vector<16xf32>
    %4 = vector.shape_cast %3 : vector<16xf32> to vector<16x1xf32>
    %cst_1 = arith.constant 3.125000e-02 : f32
    %5 = vector.broadcast %cst_1 : f32 to vector<16x1xf32>
    %6 = arith.mulf %4, %5 : vector<16x1xf32>
    %cst_2 = arith.constant 9.99999997E-7 : f32
    %7 = vector.broadcast %cst_2 : f32 to vector<16x1xf32>
    %8 = arith.addf %6, %7 : vector<16x1xf32>
    %9 = math.rsqrt %8 : vector<16x1xf32>
    %10 = vector.broadcast %9 : vector<16x1xf32> to vector<16x128xf32>
    %11 = arith.mulf %1, %10 : vector<16x128xf32>
    %12 = arith.truncf %11 : vector<16x128xf32> to vector<16x128xbf16>
    %c0_3 = arith.constant 0 : index
    %c0_4 = arith.constant 0 : index
    %13 = vector.load %arg2[%c0_3, %c0_4] : memref<1x128xf32, #tpu.memory_space<vmem>>, vector<1x128xf32>
    %14 = arith.extf %12 : vector<16x128xbf16> to vector<16x128xf32>
    %15 = vector.broadcast %13 : vector<1x128xf32> to vector<16x128xf32>
    %16 = arith.mulf %14, %15 : vector<16x128xf32>
    %c0_5 = arith.constant 0 : index
    %c0_6 = arith.constant 0 : index
    %17 = vector.load %arg3[%c0_5, %c0_6] : memref<16x128xf32, #tpu.memory_space<vmem>>, vector<16x128xf32>
    tpu.vector_store %arg3[%c0_5, %c0_6], %16 {strides = array<i32>} : memref<16x128xf32, #tpu.memory_space<vmem>>, vector<16x128xf32>,
    return
  }
  func.func @transform_0(%arg0: i32) -> (i32, i32) {
    %c0_i32 = arith.constant 0 : i32
    %c0_i32_0 = arith.constant 0 : i32
    return %arg0, %c0_i32 : i32, i32
  }
  func.func @transform_1(%arg0: i32) -> (i32, i32) {
    %c0_i32 = arith.constant 0 : i32
    %c0_i32_0 = arith.constant 0 : i32
    %c0_i32_1 = arith.constant 0 : i32
    return %c0_i32, %c0_i32_0 : i32, i32
  }
  func.func @transform_2(%arg0: i32) -> (i32, i32) {
    %c0_i32 = arith.constant 0 : i32
    %c0_i32_0 = arith.constant 0 : i32
    return %arg0, %c0_i32 : i32, i32
  }
}

</mosaic_0001>

<llo_original>
// kernel: tpu_custom_call.1
$region0: #{tpu_custom_call.1}
  #allocation0 [shape = 'u32[]', space=smem, size = 0x4, offset = 0x4, fixed_abs, tag = 'smem constant byte address 0x4 - core index']
  #allocation1 [shape = 'u32[144,128]{1,0:T(1,128)}', space=vmem, size = 0x12000, scoped, tag = 'internal scratch']
  %s0 = inlined_call_operand.hbm [shape: bf16[16,128], index: 0, kind: input, shape index: {}]
  %s1 = inlined_call_operand.vmem [shape: f32[1,128], index: 1, kind: input, shape index: {}]
  %s2 = inlined_call_operand.hbm [shape: f32[16,128], index: 2, kind: output, shape index: {}]
  %s3 = sld [smem:[#allocation0]]
  $region22: #{tpu_custom_call.1} parent=0
    _
  %s5 = ssub.s32 1, %s3
  %s6 = scalar_select 0, %s5, %s3
  $region1: #{tpu_custom_call.1} parent=0
    #allocation2 [shape = 'u8[4096]{0}', space=vmem, size = 0x1000, scoped, tag = 'input window, operand 0, single buffered']
    #allocation3 [shape = 's32[1]{0}', space=sflag, size = 0x4, scoped, tag = 'scoped memory for tpu_custom_call.1']
    #allocation4 [shape = 's32[1]{0}', space=sflag, size = 0x4, scoped, tag = 'scoped memory for tpu_custom_call.1']
    #allocation5 [shape = 'u8[8192]{0}', space=vmem, size = 0x2000, scoped, tag = 'output window, operand 0, single buffered']
    %7 = vsyncpa [#allocation3], 0
    %8 = vsyncpa [#allocation4], 0
    // Predicated region
    $region2: #{tpu_custom_call.1} parent=1 // pred_check
      _
    $region3: #{tpu_custom_call.1} parent=1 // pred_check_branch
      %10 = sbr.rel (0) target = $region5
    $region4: #{tpu_custom_call.1} parent=1 // pred_region
      %s12 = ssub.s32 128, 128
      %13 = vsyncadd [#allocation3], %s12
      %s14 = sshll.u32 [#allocation2], 4
      %s15 = int_to_ptr.vmem [resolvable:$true] %s14
      %20 = dma.hbm_to_vmem [thread:$0]  %s0, 128, %s15, [#allocation3], 64, 64, 4
    $region5: #{tpu_custom_call.1} parent=1 // pred_fallthru
      _
    // Predicated region
    $region6: #{tpu_custom_call.1} parent=1 // pred_check
      _
    $region7: #{tpu_custom_call.1} parent=1 // pred_check_branch
      %22 = sbr.rel (0) target = $region9
    $region8: #{tpu_custom_call.1} parent=1 // pred_region
      _
    $region9: #{tpu_custom_call.1} parent=1 // pred_fallthru
      _
    // Predicated region
    $region10: #{tpu_custom_call.1} parent=1 // pred_check
      _
    $region11: #{tpu_custom_call.1} parent=1 // pred_check_branch
      %24 = sbr.rel (0) target = $region13
    $region12: #{tpu_custom_call.1} parent=1 // pred_region
      %25 = dma.done [#allocation3], 128
    $region13: #{tpu_custom_call.1} parent=1 // pred_fallthru
      _
    %v26 = vld [vmem:[#allocation2] sm:$0xf]
    %v27 = vld [vmem:[#allocation2 + $0x4] sm:$0xf]
    %v28 = vunpack.c.l.bf16 %v26
    %v29 = vunpack.c.l.bf16 %v27
    %v30 = vmul.f32 %v28, %v28
    %v31 = vmul.f32 %v29, %v29
    %32 = vadd.xlane.f32.xlu0 %v30
    %v33 = vpop.xlane.xlu0 %32
    %34 = vadd.xlane.f32.xlu0 %v31
    %v35 = vpop.xlane.xlu0 %34
    %v36 = vmul.f32 %v33, 0.03125
    %v37 = vmul.f32 %v35, 0.03125
    %v38 = vadd.f32 %v36, 1e-06
    %v39 = vadd.f32 %v37, 1e-06
    %v40 = vrsqrt.pop %v38
    %v41 = vrsqrt.pop %v39
    %v42 = vmul.f32 %v28, %v40
    %v43 = vmul.f32 %v29, %v41
    %v44 = vpack.c.bf16 %v43, %v42
    %v45 = vld [vmem:[%s1] sm:$0x1]
    %v46 = vunpack.c.l.bf16 %v44
    %v47 = vunpack.c.h.bf16 %v44
    %v49 = vlaneseq
    %v50 = vshrl.u32 %v49, 7
    %v51 = vsub.s32 0, %v50
    %v52 = vrot.slane %v45, %v51
    %v54 = vmul.f32 %v46, %v52
    %v55 = vmul.f32 %v47, %v52
    %56 = vst [vmem:[#allocation5] sm:$0xff] %v54
    %57 = vst [vmem:[#allocation5 + $0x8] sm:$0xff] %v55
    // Predicated region
    $region14: #{tpu_custom_call.1} parent=1 // pred_check
      _
    $region15: #{tpu_custom_call.1} parent=1 // pred_check_branch
      %59 = sbr.rel (0) target = $region17
    $region16: #{tpu_custom_call.1} parent=1 // pred_region
      %s61 = ssub.s32 256, 256
      %62 = vsyncadd [#allocation4], %s61
      %s63 = sshll.u32 [#allocation5], 4
      %s64 = int_to_ptr.vmem [resolvable:$true] %s63
      %69 = dma.vmem_to_hbm [thread:$0]  %s64, 256, %s2, [#allocation4], 128, 128, 8
    $region17: #{tpu_custom_call.1} parent=1 // pred_fallthru
      _
    // Predicated region
    $region18: #{tpu_custom_call.1} parent=1 // pred_check
      _
    $region19: #{tpu_custom_call.1} parent=1 // pred_check_branch
      %71 = sbr.rel (0) target = $region21
    $region20: #{tpu_custom_call.1} parent=1 // pred_region
      %72 = dma.done [#allocation4], 256
    $region21: #{tpu_custom_call.1} parent=1 // pred_fallthru
      _
    %73 = vsyncpa [#allocation3], 1
    %74 = vsyncpa [#allocation4], 1

</llo_original>
